<compile_context>
chip_gen: v7x
topology: tpu7x:2x2x1
jax: 0.10.0
libtpu: 0.0.40
codegen_flags: <defaults>
</compile_context>

<pallas_src>
import functools

import jax
import jax.numpy as jnp
from jax import lax
from jax.experimental import pallas as pl
from jax.experimental.pallas import tpu as pltpu

_LANE = 128                   # lane width: batch tile must be a multiple of this
_TB_MAX = 131072              # max batch tile (lanes): 2*(4+4) MiB double-buffered @ f32
_SMALL_BATCH_FALLBACK = 1024  # below this, plain jnp matmuls beat the kernel launch cost

# Packed parameter layout, columns of an (8, 25) array:
#   [ w1 (8x6) | b1 (8x1) | w2 (8x8) | b2 (8x1) | w3 (4x8, zero-padded to 8 rows) | b3 (4x1, padded) ]
_W1_C, _B1_C, _W2_C, _B2_C, _W3_C, _B3_C = 0, 6, 7, 15, 16, 24
_PACK_COLS = 25


def _policy_mlp_kernel(p_ref, x_ref, o_ref, *, act_dtype):
    """Feature-major MLP: x_ref (6, TB), o_ref (4, TB), p_ref packed params (8, 25)."""
    p = p_ref[...]
    w1 = p[:, _W1_C:_B1_C]            # (8, 6)
    b1 = p[:, _B1_C:_W2_C]            # (8, 1)
    w2 = p[:, _W2_C:_B2_C]            # (8, 8)
    b2 = p[:, _B2_C:_W3_C]            # (8, 1)
    w3 = p[0:4, _W3_C:_B3_C]          # (4, 8)
    b3 = p[0:4, _B3_C:_PACK_COLS]     # (4, 1)

    x = x_ref[...]                                                        # (6, TB)
    h1 = jnp.tanh(
        (jnp.dot(w1, x, preferred_element_type=jnp.float32,
                 precision=lax.Precision.HIGHEST) + b1).astype(act_dtype))  # (8, TB)
    h2 = jnp.tanh(
        (jnp.dot(w2, h1, preferred_element_type=jnp.float32,
                 precision=lax.Precision.HIGHEST) + b2).astype(act_dtype))  # (8, TB)
    h3 = jnp.tanh(
        (jnp.dot(w3, h2, preferred_element_type=jnp.float32,
                 precision=lax.Precision.HIGHEST) + b3).astype(act_dtype))  # (4, TB)
    o_ref[...] = h3.astype(o_ref.dtype)


def _round_up(n, m):
    return ((n + m - 1) // m) * m


def _pack_params(params, dtype):
    """Concatenate all weights/biases into one (8, 25) array (single resident DMA)."""
    w1 = jnp.asarray(params["w1"], jnp.float32)                 # (8, 6)
    w2 = jnp.asarray(params["w2"], jnp.float32)                 # (8, 8)
    w3 = jnp.asarray(params["w3"], jnp.float32)                 # (4, 8)
    b1 = jnp.asarray(params["b1"], jnp.float32).reshape(8, 1)
    b2 = jnp.asarray(params["b2"], jnp.float32).reshape(8, 1)
    b3 = jnp.asarray(params["b3"], jnp.float32).reshape(4, 1)
    w3p = jnp.pad(w3, ((0, 4), (0, 0)))                          # (8, 8)
    b3p = jnp.pad(b3, ((0, 4), (0, 0)))                          # (8, 1)
    packed = jnp.concatenate([w1, b1, w2, b2, w3p, b3p], axis=1)  # (8, 25)
    return packed.astype(dtype)


def policy_net_forward_fm(x_fm, params, *, dtype=jnp.float32):
    """Zero-transpose path. x_fm: (6, B) feature-major. Returns (4, B) feature-major.

    dtype=jnp.bfloat16 halves HBM traffic and runs tanh in bf16 (recommended on
    v6e/v7x if the consumer tolerates it); default f32 matches PyTorch exactly
    up to f32 rounding.
    """
    x_fm = jnp.asarray(x_fm)
    if x_fm.ndim != 2 or x_fm.shape[0] != 6:
        raise ValueError(f"expected feature-major (6, B) input, got {x_fm.shape}")
    B = x_fm.shape[1]
    if B == 0:
        return jnp.zeros((4, 0), dtype)

    x_fm = x_fm.astype(dtype)
    packed = _pack_params(params, dtype)

    # Lane-aligned batch tile; aim for >= 2 grid steps so the "parallel" batch
    # axis can shard across both TensorCores on v7x (no effect on v5e/v6e).
    tb = max(_LANE, min(_TB_MAX, _round_up(pl.cdiv(B, 2), _LANE)))
    b_pad = _round_up(B, tb)
    num_tiles = b_pad // tb

    if b_pad != B:
        # Padded lanes compute tanh(bias) garbage; sliced off below.
        x_fm = jnp.pad(x_fm, ((0, 0), (0, b_pad - B)))

    out = pl.pallas_call(
        functools.partial(_policy_mlp_kernel, act_dtype=dtype),
        out_shape=jax.ShapeDtypeStruct((4, b_pad), dtype),
        grid=(num_tiles,),
        in_specs=[
            pl.BlockSpec((8, _PACK_COLS), lambda i: (0, 0)),   # packed params, resident
            pl.BlockSpec((6, tb), lambda i: (0, i)),           # x tile, batch on lanes
        ],
        out_specs=pl.BlockSpec((4, tb), lambda i: (0, i)),
        compiler_params=pltpu.CompilerParams(
            dimension_semantics=("parallel",),                 # megacore-shard batch axis
            vmem_limit_bytes=32 * 1024 * 1024,                 # >= 2x the ~16 MiB footprint
        ),
    )(packed, x_fm)

    if b_pad != B:
        out = out[:, :B]
    return out


def policy_net_forward(x, params, *, dtype=jnp.float32, use_kernel=None):
    """PyTorch-compatible forward: x of shape (6,) or (B, 6) -> (B, 4) float32.

    This compatibility wrapper transposes to/from the feature-major kernel
    layout; callers who can hold (6, B)/(4, B) arrays should use
    policy_net_forward_fm directly (zero-copy). Tiny batches fall back to plain
    jnp since the kernel launch fixed cost dominates there.
    """
    x = jnp.asarray(x, jnp.float32)
    if x.ndim == 1:
        x = x[None, :]                       # unsqueeze(0)
    x = x.reshape(-1, 6)                     # view(-1, num_flat_features)
    B = x.shape[0]
    if B == 0:
        return jnp.zeros((0, 4), jnp.float32)

    if use_kernel is None:
        use_kernel = B >= _SMALL_BATCH_FALLBACK
    if not use_kernel:
        return _reference(x, params)

    out_fm = policy_net_forward_fm(x.T, params, dtype=dtype)
    return out_fm.T.astype(jnp.float32)


def init_params(key):
    # Mirrors policyNet.__init__: weights overwritten with randn-like values;
    # biases keep nn.Linear default init U(-1/sqrt(fan_in), 1/sqrt(fan_in)).
    k1, k2, k3, kb1, kb2, kb3 = jax.random.split(key, 6)
    return {
        "w1": jax.random.normal(k1, (8, 6), jnp.float32),
        "w2": jax.random.normal(k2, (8, 8), jnp.float32),
        "w3": jax.random.normal(k3, (4, 8), jnp.float32),
        "b1": jax.random.uniform(kb1, (8,), jnp.float32,
                                 minval=-1.0 / jnp.sqrt(6.0), maxval=1.0 / jnp.sqrt(6.0)),
        "b2": jax.random.uniform(kb2, (8,), jnp.float32,
                                 minval=-1.0 / jnp.sqrt(8.0), maxval=1.0 / jnp.sqrt(8.0)),
        "b3": jax.random.uniform(kb3, (8,), jnp.float32,
                                 minval=-1.0 / jnp.sqrt(8.0), maxval=1.0 / jnp.sqrt(8.0))[:4],
    }


def _reference(x, params):
    # Pure-JAX reference (also the small-batch fallback path).
    x = jnp.asarray(x, jnp.float32).reshape(-1, 6)
    h = jnp.tanh(x @ params["w1"].T + params["b1"])
    h = jnp.tanh(h @ params["w2"].T + params["b2"])
    h = jnp.tanh(h @ params["w3"].T + params["b3"])
    return h


if __name__ == "__main__":
    key = jax.random.PRNGKey(0)
    pkey, xkey, xkey2, xkey3 = jax.random.split(key, 4)
    params = init_params(pkey)

    # Small example batch of observations, shape (2, 6) — force the kernel path.
    x = jax.random.normal(xkey, (2, 6), jnp.float32)
    out = jax.block_until_ready(policy_net_forward(x, params, use_kernel=True))
    ref = _reference(x, params)
    assert out.shape == (2, 4)
    assert jnp.allclose(out, ref, atol=1e-5, rtol=1e-5)

    # 1-D input path (unsqueeze(0) behavior).
    out1 = jax.block_until_ready(policy_net_forward(x[0], params, use_kernel=True))
    assert out1.shape == (1, 4)
    assert jnp.allclose(out1, ref[0:1], atol=1e-5, rtol=1e-5)

    # Non-lane-aligned batch: exercises padding + the 2-tile (megacore) grid.
    xb = jax.random.normal(xkey2, (300, 6), jnp.float32)
    outb = jax.block_until_ready(policy_net_forward(xb, params, use_kernel=True))
    refb = _reference(xb, params)
    assert outb.shape == (300, 4)
    assert jnp.allclose(outb, refb, atol=1e-5, rtol=1e-5)

    # Zero-transpose feature-major path, lane-aligned batch (no pad / no slice).
    xf = jax.random.normal(xkey3, (6, 256), jnp.float32)
    outf = jax.block_until_ready(policy_net_forward_fm(xf, params))
    assert outf.shape == (4, 256)
    assert jnp.allclose(outf.T, _reference(xf.T, params), atol=1e-5, rtol=1e-5)

    # Optional bf16 mode (HBM + EUP lever); loose tolerance vs the f32 reference.
    outf_bf16 = jax.block_until_ready(
        policy_net_forward_fm(xf, params, dtype=jnp.bfloat16))
    diff = jnp.max(jnp.abs(outf_bf16.astype(jnp.float32).T - _reference(xf.T, params)))
    assert outf_bf16.shape == (4, 256)
    assert bool(jnp.isfinite(diff)) and float(diff) < 0.3

    print("KERNEL_OK")
</pallas_src>

<mosaic_0001>
module attributes {stable_mosaic.version = 11 : i64} {
  func.func @_policy_mlp_kernel(%arg0: i32, %arg1: memref<8x25xf32, #tpu.memory_space<vmem>>, %arg2: memref<6x128xf32, #tpu.memory_space<vmem>>, %arg3: memref<4x128xf32, #tpu.memory_space<vmem>>) attributes {dimension_semantics = [#tpu.dimension_semantics<parallel>], iteration_bounds = array<i64: 1>, scalar_prefetch = 0 : i64, scratch_operands = 0 : i64, tpu.core_type = #tpu.core_type<tc>, window_params = [{pipeline_mode = #tpu.pipeline_mode<synchronous>, transform_indices = @transform_0, window_bounds = array<i64: 8, 25>}, {transform_indices = @transform_1, window_bounds = array<i64: 6, 128>}, {transform_indices = @transform_2, window_bounds = array<i64: 4, 128>}]} {
    %c0 = arith.constant 0 : index
    %c0_0 = arith.constant 0 : index
    %0 = vector.load %arg1[%c0, %c0_0] : memref<8x25xf32, #tpu.memory_space<vmem>>, vector<8x25xf32>
    %1 = vector.extract_strided_slice %0 {offsets = [0, 0], sizes = [8, 6], strides = [1, 1]} : vector<8x25xf32> to vector<8x6xf32>
    %2 = vector.extract_strided_slice %0 {offsets = [0, 6], sizes = [8, 1], strides = [1, 1]} : vector<8x25xf32> to vector<8x1xf32>
    %3 = vector.extract_strided_slice %0 {offsets = [0, 7], sizes = [8, 8], strides = [1, 1]} : vector<8x25xf32> to vector<8x8xf32>
    %4 = vector.extract_strided_slice %0 {offsets = [0, 15], sizes = [8, 1], strides = [1, 1]} : vector<8x25xf32> to vector<8x1xf32>
    %5 = vector.extract_strided_slice %0 {offsets = [0, 16], sizes = [4, 8], strides = [1, 1]} : vector<8x25xf32> to vector<4x8xf32>
    %6 = vector.extract_strided_slice %0 {offsets = [0, 24], sizes = [4, 1], strides = [1, 1]} : vector<8x25xf32> to vector<4x1xf32>
    %c0_1 = arith.constant 0 : index
    %c0_2 = arith.constant 0 : index
    %7 = vector.load %arg2[%c0_1, %c0_2] : memref<6x128xf32, #tpu.memory_space<vmem>>, vector<6x128xf32>
    %cst = arith.constant dense<0.000000e+00> : vector<8x128xf32>
    %8 = tpu.matmul %1, %7, %cst {dimension_numbers = #tpu.dot_dimension_numbers<[1], [0], [0], [1], [0, 0, 1, 1], [], []>, precision = #tpu.contract_precision<fp32>} : vector<8x6xf32>, vector<6x128xf32>, vector<8x128xf32> -> vector<8x128xf32>
    %9 = vector.broadcast %2 : vector<8x1xf32> to vector<8x128xf32>
    %10 = arith.addf %8, %9 : vector<8x128xf32>
    %11 = math.tanh %10 : vector<8x128xf32>
    %cst_3 = arith.constant dense<0.000000e+00> : vector<8x128xf32>
    %12 = tpu.matmul %3, %11, %cst_3 {dimension_numbers = #tpu.dot_dimension_numbers<[1], [0], [0], [1], [0, 0, 1, 1], [], []>, precision = #tpu.contract_precision<fp32>} : vector<8x8xf32>, vector<8x128xf32>, vector<8x128xf32> -> vector<8x128xf32>
    %13 = vector.broadcast %4 : vector<8x1xf32> to vector<8x128xf32>
    %14 = arith.addf %12, %13 : vector<8x128xf32>
    %15 = math.tanh %14 : vector<8x128xf32>
    %cst_4 = arith.constant dense<0.000000e+00> : vector<4x128xf32>
    %16 = tpu.matmul %5, %15, %cst_4 {dimension_numbers = #tpu.dot_dimension_numbers<[1], [0], [0], [1], [0, 0, 1, 1], [], []>, precision = #tpu.contract_precision<fp32>} : vector<4x8xf32>, vector<8x128xf32>, vector<4x128xf32> -> vector<4x128xf32>
    %17 = vector.broadcast %6 : vector<4x1xf32> to vector<4x128xf32>
    %18 = arith.addf %16, %17 : vector<4x128xf32>
    %19 = math.tanh %18 : vector<4x128xf32>
    %c0_5 = arith.constant 0 : index
    %c0_6 = arith.constant 0 : index
    %20 = vector.load %arg3[%c0_5, %c0_6] : memref<4x128xf32, #tpu.memory_space<vmem>>, vector<4x128xf32>
    tpu.vector_store %arg3[%c0_5, %c0_6], %19 {strides = array<i32>} : memref<4x128xf32, #tpu.memory_space<vmem>>, vector<4x128xf32>,
    return
  }
  func.func @transform_0(%arg0: i32) -> (i32, i32) {
    %c0_i32 = arith.constant 0 : i32
    %c0_i32_0 = arith.constant 0 : i32
    %c0_i32_1 = arith.constant 0 : i32
    return %c0_i32, %c0_i32_0 : i32, i32
  }
  func.func @transform_1(%arg0: i32) -> (i32, i32) {
    %c0_i32 = arith.constant 0 : i32
    %c0_i32_0 = arith.constant 0 : i32
    return %c0_i32, %arg0 : i32, i32
  }
  func.func @transform_2(%arg0: i32) -> (i32, i32) {
    %c0_i32 = arith.constant 0 : i32
    %c0_i32_0 = arith.constant 0 : i32
    return %c0_i32, %arg0 : i32, i32
  }
}

</mosaic_0001>

<llo_original>
// kernel: tpu_custom_call.1
$region0: #{tpu_custom_call.1}
  #allocation0 [shape = 'u32[]', space=smem, size = 0x4, offset = 0x4, fixed_abs, tag = 'smem constant byte address 0x4 - core index']
  #allocation1 [shape = 'u32[144,128]{1,0:T(1,128)}', space=vmem, size = 0x12000, scoped, tag = 'internal scratch']
  %s0 = inlined_call_operand.hbm [shape: f32[8,25], index: 0, kind: input, shape index: {}]
  %s1 = inlined_call_operand.hbm [shape: f32[6,128], index: 1, kind: input, shape index: {}]
  %s2 = inlined_call_operand.hbm [shape: f32[4,128], index: 2, kind: output, shape index: {}]
  %s3 = sld [smem:[#allocation0]]
  $region26: #{tpu_custom_call.1} parent=0
    _
  %s5 = ssub.s32 1, %s3
  %s6 = scalar_select 0, %s5, %s3
  $region1: #{tpu_custom_call.1} parent=0
    #allocation2 [shape = 'u8[4096]{0}', space=vmem, size = 0x1000, scoped, tag = 'input window, operand 0, single buffered']
    #allocation3 [shape = 's32[1]{0}', space=sflag, size = 0x4, scoped, tag = 'scoped memory for tpu_custom_call.1']
    #allocation4 [shape = 's32[1]{0}', space=sflag, size = 0x4, scoped, tag = 'scoped memory for tpu_custom_call.1']
    #allocation5 [shape = 'u8[4096]{0}', space=vmem, size = 0x1000, scoped, tag = 'input window, operand 1, single buffered']
    #allocation6 [shape = 's32[1]{0}', space=sflag, size = 0x4, scoped, tag = 'scoped memory for tpu_custom_call.1']
    #allocation7 [shape = 'u8[2048]{0}', space=vmem, size = 0x800, scoped, tag = 'output window, operand 0, single buffered']
    %7 = vsyncpa [#allocation3], 0
    %8 = vsyncpa [#allocation6], 0
    %9 = vsyncpa [#allocation4], 0
    // Predicated region
    $region2: #{tpu_custom_call.1} parent=1 // pred_check
      _
    $region3: #{tpu_custom_call.1} parent=1 // pred_check_branch
      %11 = sbr.rel (0) target = $region5
    $region4: #{tpu_custom_call.1} parent=1 // pred_region
      %s13 = ssub.s32 128, 128
      %14 = vsyncadd [#allocation3], %s13
      %s16 = sshll.u32 [#allocation2], 4
      %s17 = int_to_ptr.vmem [resolvable:$true] %s16
      %19 = dma.hbm_to_vmem [thread:$0]  %s0, 128, %s17, [#allocation3]
    $region5: #{tpu_custom_call.1} parent=1 // pred_fallthru
      _
    // Predicated region
    $region6: #{tpu_custom_call.1} parent=1 // pred_check
      _
    $region7: #{tpu_custom_call.1} parent=1 // pred_check_branch
      %21 = sbr.rel (0) target = $region9
    $region8: #{tpu_custom_call.1} parent=1 // pred_region
      %s23 = ssub.s32 128, 128
      %24 = vsyncadd [#allocation6], %s23
      %s26 = sshll.u32 [#allocation5], 4
      %s27 = int_to_ptr.vmem [resolvable:$true] %s26
      %29 = dma.hbm_to_vmem [thread:$0]  %s1, 128, %s27, [#allocation6]
    $region9: #{tpu_custom_call.1} parent=1 // pred_fallthru
      _
    // Predicated region
    $region10: #{tpu_custom_call.1} parent=1 // pred_check
      _
    $region11: #{tpu_custom_call.1} parent=1 // pred_check_branch
      %31 = sbr.rel (0) target = $region13
    $region12: #{tpu_custom_call.1} parent=1 // pred_region
      %32 = dma.done [#allocation3], 128
    $region13: #{tpu_custom_call.1} parent=1 // pred_fallthru
      _
    // Predicated region
    $region14: #{tpu_custom_call.1} parent=1 // pred_check
      _
    $region15: #{tpu_custom_call.1} parent=1 // pred_check_branch
      %34 = sbr.rel (0) target = $region17
    $region16: #{tpu_custom_call.1} parent=1 // pred_region
      %35 = dma.done [#allocation6], 128
    $region17: #{tpu_custom_call.1} parent=1 // pred_fallthru
      _
    %v36 = vld [vmem:[#allocation2] sm:$0xff]
    %v37 = vld [vmem:[#allocation5] sm:$0x3f]
    %39 = vset.pattern.permute.xlu0 6
    %40 = vperm.xlu0 %39, %v36
    %v41 = vpop.permute.xlu0 %40
    %vm43 = vcmask 48128
    %v44 = vsel %vm43, %v36, 0
    %vm46 = vcmask 1045504
    %v48 = vsel %vm46, %v37, 0
    %50 = vmatprep.subr.mxu0 0.0
    %v51 = vand.u32 %v48, 4294901760
    %52 = vmatpush1.msra.mxu0 %v51
    %53 = vmatprep.subr.mxu0 0.0
    %54 = vmatpush1.msra.mxu0 0.0
    %55 = vmatprep.subr.mxu0 0.0
    %56 = vmatpush1.msra.mxu0 0.0
    %57 = vmatprep.subr.mxu0 0.0
    %58 = vmatpush1.msra.mxu0 0.0
    %59 = vmatprep.subr.mxu0 0.0
    %60 = vmatpush1.msra.mxu0 0.0
    %61 = vmatprep.subr.mxu0 0.0
    %62 = vmatpush1.msra.mxu0 0.0
    %63 = vmatprep.subr.mxu0 0.0
    %64 = vmatpush1.msra.mxu0 0.0
    %65 = vmatprep.subr.mxu0 0.0
    %66 = vmatpush1.msra.mxu0 0.0
    %67 = vmatprep.subr.mxu0 0.0
    %68 = vmatpush1.msra.mxu0 0.0
    %69 = vmatprep.subr.mxu0 0.0
    %70 = vmatpush1.msra.mxu0 0.0
    %71 = vmatprep.subr.mxu0 0.0
    %72 = vmatpush1.msra.mxu0 0.0
    %73 = vmatprep.subr.mxu0 0.0
    %74 = vmatpush1.msra.mxu0 0.0
    %75 = vmatprep.subr.mxu0 0.0
    %76 = vmatpush1.msra.mxu0 0.0
    %77 = vmatprep.subr.mxu0 0.0
    %78 = vmatpush1.msra.mxu0 0.0
    %79 = vmatprep.subr.mxu0 0.0
    %80 = vmatpush1.msra.mxu0 0.0
    %81 = vmatprep.subr.mxu0 0.0
    %82 = vmatpush1.msra.mxu0 0.0
    %83 = vmatprep.subr.mxu0 0.0
    %84 = vmatpush1.msra.mxu0 0.0
    %85 = vmatprep.subr.mxu0 0.0
    %86 = vmatpush1.msra.mxu0 0.0
    %87 = vmatprep.subr.mxu0 0.0
    %88 = vmatpush1.msra.mxu0 0.0
    %89 = vmatprep.subr.mxu0 0.0
    %90 = vmatpush1.msra.mxu0 0.0
    %91 = vmatprep.subr.mxu0 0.0
    %92 = vmatpush1.msra.mxu0 0.0
    %93 = vmatprep.subr.mxu0 0.0
    %94 = vmatpush1.msra.mxu0 0.0
    %95 = vmatprep.subr.mxu0 0.0
    %96 = vmatpush1.msra.mxu0 0.0
    %97 = vmatprep.subr.mxu0 0.0
    %98 = vmatpush1.msra.mxu0 0.0
    %99 = vmatprep.subr.mxu0 0.0
    %100 = vmatpush1.msra.mxu0 0.0
    %101 = vmatprep.subr.mxu0 0.0
    %102 = vmatpush1.msra.mxu0 0.0
    %103 = vmatprep.subr.mxu0 0.0
    %104 = vmatpush1.msra.mxu0 0.0
    %105 = vmatprep.subr.mxu0 0.0
    %106 = vmatpush1.msra.mxu0 0.0
    %107 = vmatprep.subr.mxu0 0.0
    %108 = vmatpush1.msra.mxu0 0.0
    %109 = vmatprep.subr.mxu0 0.0
    %110 = vmatpush1.msra.mxu0 0.0
    %111 = vmatprep.subr.mxu0 0.0
    %112 = vmatpush1.msra.mxu0 0.0
    %113 = vmatprep.subr.mxu0 0.0
    %114 = vmatpush1.msra.mxu0 0.0
    %115 = vmatprep.mubr.f32.mxu0 0.0
    %v116 = vand.u32 %v44, 4294901760
    %v117 = vsub.f32 %v44, %v116
    %v118 = vand.u32 %v117, 4294901760
    %v119 = vsub.f32 %v117, %v118
    %v120 = vand.u32 %v119, 4294901760
    %121 = vmatmul.mubr.f32.gmra.mrb[0].mxu0 %v120
    %v122 = vpop.f32.mrb[0].mxu0
    %v123 = vadd.f32 %v41, %v122
    %v124 = vpop.f32.mrb[0].mxu0
    %125 = vdwg.mxu0
    %126 = vmatprep.subr.mxu0 0.0
    %v127 = vand.u32 %v48, 4294901760
    %v128 = vsub.f32 %v48, %v127
    %v129 = vand.u32 %v128, 4294901760
    %v130 = vsub.f32 %v128, %v129
    %v131 = vand.u32 %v130, 4294901760
    %132 = vmatpush1.msra.mxu0 %v131
    %133 = vmatprep.subr.mxu0 0.0
    %134 = vmatpush1.msra.mxu0 0.0
    %135 = vmatprep.subr.mxu0 0.0
    %136 = vmatpush1.msra.mxu0 0.0
    %137 = vmatprep.subr.mxu0 0.0
    %138 = vmatpush1.msra.mxu0 0.0
    %139 = vmatprep.subr.mxu0 0.0
    %140 = vmatpush1.msra.mxu0 0.0
    %141 = vmatprep.subr.mxu0 0.0
    %142 = vmatpush1.msra.mxu0 0.0
    %143 = vmatprep.subr.mxu0 0.0
    %144 = vmatpush1.msra.mxu0 0.0
    %145 = vmatprep.subr.mxu0 0.0
    %146 = vmatpush1.msra.mxu0 0.0
    %147 = vmatprep.subr.mxu0 0.0
    %148 = vmatpush1.msra.mxu0 0.0
    %149 = vmatprep.subr.mxu0 0.0
    %150 = vmatpush1.msra.mxu0 0.0
    %151 = vmatprep.subr.mxu0 0.0
    %152 = vmatpush1.msra.mxu0 0.0
    %153 = vmatprep.subr.mxu0 0.0
    %154 = vmatpush1.msra.mxu0 0.0
    %155 = vmatprep.subr.mxu0 0.0
    %156 = vmatpush1.msra.mxu0 0.0
    %157 = vmatprep.subr.mxu0 0.0
    %158 = vmatpush1.msra.mxu0 0.0
    %159 = vmatprep.subr.mxu0 0.0
    %160 = vmatpush1.msra.mxu0 0.0
    %161 = vmatprep.subr.mxu0 0.0
    %162 = vmatpush1.msra.mxu0 0.0
    %163 = vmatprep.subr.mxu0 0.0
    %164 = vmatpush1.msra.mxu0 0.0
    %165 = vmatprep.subr.mxu0 0.0
    %166 = vmatpush1.msra.mxu0 0.0
    %167 = vmatprep.subr.mxu0 0.0
    %168 = vmatpush1.msra.mxu0 0.0
    %169 = vmatprep.subr.mxu0 0.0
    %170 = vmatpush1.msra.mxu0 0.0
    %171 = vmatprep.subr.mxu0 0.0
    %172 = vmatpush1.msra.mxu0 0.0
    %173 = vmatprep.subr.mxu0 0.0
    %174 = vmatpush1.msra.mxu0 0.0
    %175 = vmatprep.subr.mxu0 0.0
    %176 = vmatpush1.msra.mxu0 0.0
    %177 = vmatprep.subr.mxu0 0.0
    %178 = vmatpush1.msra.mxu0 0.0
    %179 = vmatprep.subr.mxu0 0.0
    %180 = vmatpush1.msra.mxu0 0.0
    %181 = vmatprep.subr.mxu0 0.0
    %182 = vmatpush1.msra.mxu0 0.0
    %183 = vmatprep.subr.mxu0 0.0
    %184 = vmatpush1.msra.mxu0 0.0
    %185 = vmatprep.subr.mxu0 0.0
    %186 = vmatpush1.msra.mxu0 0.0
    %187 = vmatprep.subr.mxu0 0.0
    %188 = vmatpush1.msra.mxu0 0.0
    %189 = vmatprep.subr.mxu0 0.0
    %190 = vmatpush1.msra.mxu0 0.0
    %191 = vmatprep.subr.mxu0 0.0
    %192 = vmatpush1.msra.mxu0 0.0
    %193 = vmatprep.subr.mxu0 0.0
    %194 = vmatpush1.msra.mxu0 0.0
    %195 = vmatprep.mubr.f32.mxu0 0.0
    %v196 = vand.u32 %v44, 4294901760
    %197 = vmatmul.mubr.f32.gmra.mrb[0].mxu0 %v196
    %v198 = vpop.f32.mrb[0].mxu0
    %v199 = vadd.f32 %v123, %v198
    %v200 = vpop.f32.mrb[0].mxu0
    %201 = vdwg.mxu0
    %202 = vmatprep.subr.mxu0 0.0
    %v203 = vand.u32 %v48, 4294901760
    %v204 = vsub.f32 %v48, %v203
    %205 = vmatpush1.msra.mxu0 %v204
    %206 = vmatprep.subr.mxu0 0.0
    %207 = vmatpush1.msra.mxu0 0.0
    %208 = vmatprep.subr.mxu0 0.0
    %209 = vmatpush1.msra.mxu0 0.0
    %210 = vmatprep.subr.mxu0 0.0
    %211 = vmatpush1.msra.mxu0 0.0
    %212 = vmatprep.subr.mxu0 0.0
    %213 = vmatpush1.msra.mxu0 0.0
    %214 = vmatprep.subr.mxu0 0.0
    %215 = vmatpush1.msra.mxu0 0.0
    %216 = vmatprep.subr.mxu0 0.0
    %217 = vmatpush1.msra.mxu0 0.0
    %218 = vmatprep.subr.mxu0 0.0
    %219 = vmatpush1.msra.mxu0 0.0
    %220 = vmatprep.subr.mxu0 0.0
    %221 = vmatpush1.msra.mxu0 0.0
    %222 = vmatprep.subr.mxu0 0.0
    %223 = vmatpush1.msra.mxu0 0.0
    %224 = vmatprep.subr.mxu0 0.0
    %225 = vmatpush1.msra.mxu0 0.0
    %226 = vmatprep.subr.mxu0 0.0
    %227 = vmatpush1.msra.mxu0 0.0
    %228 = vmatprep.subr.mxu0 0.0
    %229 = vmatpush1.msra.mxu0 0.0
    %230 = vmatprep.subr.mxu0 0.0
    %231 = vmatpush1.msra.mxu0 0.0
    %232 = vmatprep.subr.mxu0 0.0
    %233 = vmatpush1.msra.mxu0 0.0
    %234 = vmatprep.subr.mxu0 0.0
    %235 = vmatpush1.msra.mxu0 0.0
    %236 = vmatprep.subr.mxu0 0.0
    %237 = vmatpush1.msra.mxu0 0.0
    %238 = vmatprep.subr.mxu0 0.0
    %239 = vmatpush1.msra.mxu0 0.0
    %240 = vmatprep.subr.mxu0 0.0
    %241 = vmatpush1.msra.mxu0 0.0
    %242 = vmatprep.subr.mxu0 0.0
    %243 = vmatpush1.msra.mxu0 0.0
    %244 = vmatprep.subr.mxu0 0.0
    %245 = vmatpush1.msra.mxu0 0.0
    %246 = vmatprep.subr.mxu0 0.0
    %247 = vmatpush1.msra.mxu0 0.0
    %248 = vmatprep.subr.mxu0 0.0
    %249 = vmatpush1.msra.mxu0 0.0
    %250 = vmatprep.subr.mxu0 0.0
    %251 = vmatpush1.msra.mxu0 0.0
    %252 = vmatprep.subr.mxu0 0.0
    %253 = vmatpush1.msra.mxu0 0.0
    %254 = vmatprep.subr.mxu0 0.0
    %255 = vmatpush1.msra.mxu0 0.0
    %256 = vmatprep.subr.mxu0 0.0
    %257 = vmatpush1.msra.mxu0 0.0
    %258 = vmatprep.subr.mxu0 0.0
    %259 = vmatpush1.msra.mxu0 0.0
    %260 = vmatprep.subr.mxu0 0.0
    %261 = vmatpush1.msra.mxu0 0.0
    %262 = vmatprep.subr.mxu0 0.0
    %263 = vmatpush1.msra.mxu0 0.0
    %264 = vmatprep.subr.mxu0 0.0
    %265 = vmatpush1.msra.mxu0 0.0
    %266 = vmatprep.subr.mxu0 0.0
    %267 = vmatpush1.msra.mxu0 0.0
    %268 = vmatprep.mubr.f32.mxu0 0.0
    %v269 = vand.u32 %v44, 4294901760
    %v270 = vsub.f32 %v44, %v269
    %271 = vmatmul.mubr.f32.gmra.mrb[0].mxu0 %v270
    %v272 = vpop.f32.mrb[0].mxu0
    %v273 = vadd.f32 %v199, %v272
    %v274 = vpop.f32.mrb[0].mxu0
    %275 = vdwg.mxu0
    %276 = vmatprep.subr.mxu0 0.0
    %v277 = vand.u32 %v48, 4294901760
    %278 = vmatpush1.msra.mxu0 %v277
    %279 = vmatprep.subr.mxu0 0.0
    %280 = vmatpush1.msra.mxu0 0.0
    %281 = vmatprep.subr.mxu0 0.0
    %282 = vmatpush1.msra.mxu0 0.0
    %283 = vmatprep.subr.mxu0 0.0
    %284 = vmatpush1.msra.mxu0 0.0
    %285 = vmatprep.subr.mxu0 0.0
    %286 = vmatpush1.msra.mxu0 0.0
    %287 = vmatprep.subr.mxu0 0.0
    %288 = vmatpush1.msra.mxu0 0.0
    %289 = vmatprep.subr.mxu0 0.0
    %290 = vmatpush1.msra.mxu0 0.0
    %291 = vmatprep.subr.mxu0 0.0
    %292 = vmatpush1.msra.mxu0 0.0
    %293 = vmatprep.subr.mxu0 0.0
    %294 = vmatpush1.msra.mxu0 0.0
    %295 = vmatprep.subr.mxu0 0.0
    %296 = vmatpush1.msra.mxu0 0.0
    %297 = vmatprep.subr.mxu0 0.0
    %298 = vmatpush1.msra.mxu0 0.0
    %299 = vmatprep.subr.mxu0 0.0
    %300 = vmatpush1.msra.mxu0 0.0
    %301 = vmatprep.subr.mxu0 0.0
    %302 = vmatpush1.msra.mxu0 0.0
    %303 = vmatprep.subr.mxu0 0.0
    %304 = vmatpush1.msra.mxu0 0.0
    %305 = vmatprep.subr.mxu0 0.0
    %306 = vmatpush1.msra.mxu0 0.0
    %307 = vmatprep.subr.mxu0 0.0
    %308 = vmatpush1.msra.mxu0 0.0
    %309 = vmatprep.subr.mxu0 0.0
    %310 = vmatpush1.msra.mxu0 0.0
    %311 = vmatprep.subr.mxu0 0.0
    %312 = vmatpush1.msra.mxu0 0.0
    %313 = vmatprep.subr.mxu0 0.0
    %314 = vmatpush1.msra.mxu0 0.0
    %315 = vmatprep.subr.mxu0 0.0
    %316 = vmatpush1.msra.mxu0 0.0
    %317 = vmatprep.subr.mxu0 0.0
    %318 = vmatpush1.msra.mxu0 0.0
    %319 = vmatprep.subr.mxu0 0.0
    %320 = vmatpush1.msra.mxu0 0.0
    %321 = vmatprep.subr.mxu0 0.0
    %322 = vmatpush1.msra.mxu0 0.0
    %323 = vmatprep.subr.mxu0 0.0
    %324 = vmatpush1.msra.mxu0 0.0
    %325 = vmatprep.subr.mxu0 0.0
    %326 = vmatpush1.msra.mxu0 0.0
    %327 = vmatprep.subr.mxu0 0.0
    %328 = vmatpush1.msra.mxu0 0.0
    %329 = vmatprep.subr.mxu0 0.0
    %330 = vmatpush1.msra.mxu0 0.0
    %331 = vmatprep.subr.mxu0 0.0
    %332 = vmatpush1.msra.mxu0 0.0
    %333 = vmatprep.subr.mxu0 0.0
    %334 = vmatpush1.msra.mxu0 0.0
    %335 = vmatprep.subr.mxu0 0.0
    %336 = vmatpush1.msra.mxu0 0.0
    %337 = vmatprep.subr.mxu0 0.0
    %338 = vmatpush1.msra.mxu0 0.0
    %339 = vmatprep.subr.mxu0 0.0
    %340 = vmatpush1.msra.mxu0 0.0
    %341 = vmatprep.mubr.f32.mxu0 0.0
    %v342 = vand.u32 %v44, 4294901760
    %v343 = vsub.f32 %v44, %v342
    %v344 = vand.u32 %v343, 4294901760
    %345 = vmatmul.mubr.f32.gmra.mrb[0].mxu0 %v344
    %v346 = vpop.f32.mrb[0].mxu0
    %v347 = vadd.f32 %v273, %v346
    %v348 = vpop.f32.mrb[0].mxu0
    %349 = vdwg.mxu0
    %350 = vmatprep.subr.mxu0 0.0
    %v351 = vand.u32 %v48, 4294901760
    %v352 = vsub.f32 %v48, %v351
    %v353 = vand.u32 %v352, 4294901760
    %354 = vmatpush1.msra.mxu0 %v353
    %355 = vmatprep.subr.mxu0 0.0
    %356 = vmatpush1.msra.mxu0 0.0
    %357 = vmatprep.subr.mxu0 0.0
    %358 = vmatpush1.msra.mxu0 0.0
    %359 = vmatprep.subr.mxu0 0.0
    %360 = vmatpush1.msra.mxu0 0.0
    %361 = vmatprep.subr.mxu0 0.0
    %362 = vmatpush1.msra.mxu0 0.0
    %363 = vmatprep.subr.mxu0 0.0
    %364 = vmatpush1.msra.mxu0 0.0
    %365 = vmatprep.subr.mxu0 0.0
    %366 = vmatpush1.msra.mxu0 0.0
    %367 = vmatprep.subr.mxu0 0.0
    %368 = vmatpush1.msra.mxu0 0.0
    %369 = vmatprep.subr.mxu0 0.0
    %370 = vmatpush1.msra.mxu0 0.0
    %371 = vmatprep.subr.mxu0 0.0
    %372 = vmatpush1.msra.mxu0 0.0
    %373 = vmatprep.subr.mxu0 0.0
    %374 = vmatpush1.msra.mxu0 0.0
    %375 = vmatprep.subr.mxu0 0.0
    %376 = vmatpush1.msra.mxu0 0.0
    %377 = vmatprep.subr.mxu0 0.0
    %378 = vmatpush1.msra.mxu0 0.0
    %379 = vmatprep.subr.mxu0 0.0
    %380 = vmatpush1.msra.mxu0 0.0
    %381 = vmatprep.subr.mxu0 0.0
    %382 = vmatpush1.msra.mxu0 0.0
    %383 = vmatprep.subr.mxu0 0.0
    %384 = vmatpush1.msra.mxu0 0.0
    %385 = vmatprep.subr.mxu0 0.0
    %386 = vmatpush1.msra.mxu0 0.0
    %387 = vmatprep.subr.mxu0 0.0
    %388 = vmatpush1.msra.mxu0 0.0
    %389 = vmatprep.subr.mxu0 0.0
    %390 = vmatpush1.msra.mxu0 0.0
    %391 = vmatprep.subr.mxu0 0.0
    %392 = vmatpush1.msra.mxu0 0.0
    %393 = vmatprep.subr.mxu0 0.0
    %394 = vmatpush1.msra.mxu0 0.0
    %395 = vmatprep.subr.mxu0 0.0
    %396 = vmatpush1.msra.mxu0 0.0
    %397 = vmatprep.subr.mxu0 0.0
    %398 = vmatpush1.msra.mxu0 0.0
    %399 = vmatprep.subr.mxu0 0.0
    %400 = vmatpush1.msra.mxu0 0.0
    %401 = vmatprep.subr.mxu0 0.0
    %402 = vmatpush1.msra.mxu0 0.0
    %403 = vmatprep.subr.mxu0 0.0
    %404 = vmatpush1.msra.mxu0 0.0
    %405 = vmatprep.subr.mxu0 0.0
    %406 = vmatpush1.msra.mxu0 0.0
    %407 = vmatprep.subr.mxu0 0.0
    %408 = vmatpush1.msra.mxu0 0.0
    %409 = vmatprep.subr.mxu0 0.0
    %410 = vmatpush1.msra.mxu0 0.0
    %411 = vmatprep.subr.mxu0 0.0
    %412 = vmatpush1.msra.mxu0 0.0
    %413 = vmatprep.subr.mxu0 0.0
    %414 = vmatpush1.msra.mxu0 0.0
    %415 = vmatprep.subr.mxu0 0.0
    %416 = vmatpush1.msra.mxu0 0.0
    %417 = vmatprep.mubr.f32.mxu0 0.0
    %v418 = vand.u32 %v44, 4294901760
    %419 = vmatmul.mubr.f32.gmra.mrb[0].mxu0 %v418
    %v420 = vpop.f32.mrb[0].mxu0
    %v421 = vadd.f32 %v347, %v420
    %v422 = vpop.f32.mrb[0].mxu0
    %423 = vdwg.mxu0
    %424 = vmatprep.subr.mxu0 0.0
    %v425 = vand.u32 %v48, 4294901760
    %426 = vmatpush1.msra.mxu0 %v425
    %427 = vmatprep.subr.mxu0 0.0
    %428 = vmatpush1.msra.mxu0 0.0
    %429 = vmatprep.subr.mxu0 0.0
    %430 = vmatpush1.msra.mxu0 0.0
    %431 = vmatprep.subr.mxu0 0.0
    %432 = vmatpush1.msra.mxu0 0.0
    %433 = vmatprep.subr.mxu0 0.0
    %434 = vmatpush1.msra.mxu0 0.0
    %435 = vmatprep.subr.mxu0 0.0
    %436 = vmatpush1.msra.mxu0 0.0
    %437 = vmatprep.subr.mxu0 0.0
    %438 = vmatpush1.msra.mxu0 0.0
    %439 = vmatprep.subr.mxu0 0.0
    %440 = vmatpush1.msra.mxu0 0.0
    %441 = vmatprep.subr.mxu0 0.0
    %442 = vmatpush1.msra.mxu0 0.0
    %443 = vmatprep.subr.mxu0 0.0
    %444 = vmatpush1.msra.mxu0 0.0
    %445 = vmatprep.subr.mxu0 0.0
    %446 = vmatpush1.msra.mxu0 0.0
    %447 = vmatprep.subr.mxu0 0.0
    %448 = vmatpush1.msra.mxu0 0.0
    %449 = vmatprep.subr.mxu0 0.0
    %450 = vmatpush1.msra.mxu0 0.0
    %451 = vmatprep.subr.mxu0 0.0
    %452 = vmatpush1.msra.mxu0 0.0
    %453 = vmatprep.subr.mxu0 0.0
    %454 = vmatpush1.msra.mxu0 0.0
    %455 = vmatprep.subr.mxu0 0.0
    %456 = vmatpush1.msra.mxu0 0.0
    %457 = vmatprep.subr.mxu0 0.0
    %458 = vmatpush1.msra.mxu0 0.0
    %459 = vmatprep.subr.mxu0 0.0
    %460 = vmatpush1.msra.mxu0 0.0
    %461 = vmatprep.subr.mxu0 0.0
    %462 = vmatpush1.msra.mxu0 0.0
    %463 = vmatprep.subr.mxu0 0.0
    %464 = vmatpush1.msra.mxu0 0.0
    %465 = vmatprep.subr.mxu0 0.0
    %466 = vmatpush1.msra.mxu0 0.0
    %467 = vmatprep.subr.mxu0 0.0
    %468 = vmatpush1.msra.mxu0 0.0
    %469 = vmatprep.subr.mxu0 0.0
    %470 = vmatpush1.msra.mxu0 0.0
    %471 = vmatprep.subr.mxu0 0.0
    %472 = vmatpush1.msra.mxu0 0.0
    %473 = vmatprep.subr.mxu0 0.0
    %474 = vmatpush1.msra.mxu0 0.0
    %475 = vmatprep.subr.mxu0 0.0
    %476 = vmatpush1.msra.mxu0 0.0
    %477 = vmatprep.subr.mxu0 0.0
    %478 = vmatpush1.msra.mxu0 0.0
    %479 = vmatprep.subr.mxu0 0.0
    %480 = vmatpush1.msra.mxu0 0.0
    %481 = vmatprep.subr.mxu0 0.0
    %482 = vmatpush1.msra.mxu0 0.0
    %483 = vmatprep.subr.mxu0 0.0
    %484 = vmatpush1.msra.mxu0 0.0
    %485 = vmatprep.subr.mxu0 0.0
    %486 = vmatpush1.msra.mxu0 0.0
    %487 = vmatprep.subr.mxu0 0.0
    %488 = vmatpush1.msra.mxu0 0.0
    %489 = vmatprep.mubr.f32.mxu0 0.0
    %v490 = vand.u32 %v44, 4294901760
    %491 = vmatmul.mubr.f32.gmra.mrb[0].mxu0 %v490
    %v492 = vpop.f32.mrb[0].mxu0
    %v493 = vadd.f32 %v421, %v492
    %v494 = vpop.f32.mrb[0].mxu0
    %495 = vdwg.mxu0
    %v496 = vtanh.pop %v493
    %497 = vset.pattern.permute.xlu0 15
    %498 = vperm.xlu0 %497, %v36
    %v499 = vpop.permute.xlu0 %498
    %501 = vrot.lane.b32.xlu0 %v36, 121
    %v502 = vpop.permute.xlu0 %501
    %vm503 = vcmask 64512
    %v504 = vsel %vm503, %v502, 0
    %506 = vmatprep.subr.mxu0 0.0
    %v507 = vand.u32 %v496, 4294901760
    %508 = vmatpush1.msra.mxu0 %v507
    %509 = vmatprep.subr.mxu0 0.0
    %510 = vmatpush1.msra.mxu0 0.0
    %511 = vmatprep.subr.mxu0 0.0
    %512 = vmatpush1.msra.mxu0 0.0
    %513 = vmatprep.subr.mxu0 0.0
    %514 = vmatpush1.msra.mxu0 0.0
    %515 = vmatprep.subr.mxu0 0.0
    %516 = vmatpush1.msra.mxu0 0.0
    %517 = vmatprep.subr.mxu0 0.0
    %518 = vmatpush1.msra.mxu0 0.0
    %519 = vmatprep.subr.mxu0 0.0
    %520 = vmatpush1.msra.mxu0 0.0
    %521 = vmatprep.subr.mxu0 0.0
    %522 = vmatpush1.msra.mxu0 0.0
    %523 = vmatprep.subr.mxu0 0.0
    %524 = vmatpush1.msra.mxu0 0.0
    %525 = vmatprep.subr.mxu0 0.0
    %526 = vmatpush1.msra.mxu0 0.0
    %527 = vmatprep.subr.mxu0 0.0
    %528 = vmatpush1.msra.mxu0 0.0
    %529 = vmatprep.subr.mxu0 0.0
    %530 = vmatpush1.msra.mxu0 0.0
    %531 = vmatprep.subr.mxu0 0.0
    %532 = vmatpush1.msra.mxu0 0.0
    %533 = vmatprep.subr.mxu0 0.0
    %534 = vmatpush1.msra.mxu0 0.0
    %535 = vmatprep.subr.mxu0 0.0
    %536 = vmatpush1.msra.mxu0 0.0
    %537 = vmatprep.subr.mxu0 0.0
    %538 = vmatpush1.msra.mxu0 0.0
    %539 = vmatprep.subr.mxu0 0.0
    %540 = vmatpush1.msra.mxu0 0.0
    %541 = vmatprep.subr.mxu0 0.0
    %542 = vmatpush1.msra.mxu0 0.0
    %543 = vmatprep.subr.mxu0 0.0
    %544 = vmatpush1.msra.mxu0 0.0
    %545 = vmatprep.subr.mxu0 0.0
    %546 = vmatpush1.msra.mxu0 0.0
    %547 = vmatprep.subr.mxu0 0.0
    %548 = vmatpush1.msra.mxu0 0.0
    %549 = vmatprep.subr.mxu0 0.0
    %550 = vmatpush1.msra.mxu0 0.0
    %551 = vmatprep.subr.mxu0 0.0
    %552 = vmatpush1.msra.mxu0 0.0
    %553 = vmatprep.subr.mxu0 0.0
    %554 = vmatpush1.msra.mxu0 0.0
    %555 = vmatprep.subr.mxu0 0.0
    %556 = vmatpush1.msra.mxu0 0.0
    %557 = vmatprep.subr.mxu0 0.0
    %558 = vmatpush1.msra.mxu0 0.0
    %559 = vmatprep.subr.mxu0 0.0
    %560 = vmatpush1.msra.mxu0 0.0
    %561 = vmatprep.subr.mxu0 0.0
    %562 = vmatpush1.msra.mxu0 0.0
    %563 = vmatprep.subr.mxu0 0.0
    %564 = vmatpush1.msra.mxu0 0.0
    %565 = vmatprep.subr.mxu0 0.0
    %566 = vmatpush1.msra.mxu0 0.0
    %567 = vmatprep.subr.mxu0 0.0
    %568 = vmatpush1.msra.mxu0 0.0
    %569 = vmatprep.subr.mxu0 0.0
    %570 = vmatpush1.msra.mxu0 0.0
    %571 = vmatprep.mubr.f32.mxu0 0.0
    %v572 = vand.u32 %v504, 4294901760
    %v573 = vsub.f32 %v504, %v572
    %v574 = vand.u32 %v573, 4294901760
    %v575 = vsub.f32 %v573, %v574
    %v576 = vand.u32 %v575, 4294901760
    %577 = vmatmul.mubr.f32.gmra.mrb[0].mxu0 %v576
    %v578 = vpop.f32.mrb[0].mxu0
    %v579 = vadd.f32 %v499, %v578
    %v580 = vpop.f32.mrb[0].mxu0
    %581 = vdwg.mxu0
    %582 = vmatprep.subr.mxu0 0.0
    %v583 = vand.u32 %v496, 4294901760
    %v584 = vsub.f32 %v496, %v583
    %v585 = vand.u32 %v584, 4294901760
    %v586 = vsub.f32 %v584, %v585
    %v587 = vand.u32 %v586, 4294901760
    %588 = vmatpush1.msra.mxu0 %v587
    %589 = vmatprep.subr.mxu0 0.0
    %590 = vmatpush1.msra.mxu0 0.0
    %591 = vmatprep.subr.mxu0 0.0
    %592 = vmatpush1.msra.mxu0 0.0
    %593 = vmatprep.subr.mxu0 0.0
    %594 = vmatpush1.msra.mxu0 0.0
    %595 = vmatprep.subr.mxu0 0.0
    %596 = vmatpush1.msra.mxu0 0.0
    %597 = vmatprep.subr.mxu0 0.0
    %598 = vmatpush1.msra.mxu0 0.0
    %599 = vmatprep.subr.mxu0 0.0
    %600 = vmatpush1.msra.mxu0 0.0
    %601 = vmatprep.subr.mxu0 0.0
    %602 = vmatpush1.msra.mxu0 0.0
    %603 = vmatprep.subr.mxu0 0.0
    %604 = vmatpush1.msra.mxu0 0.0
    %605 = vmatprep.subr.mxu0 0.0
    %606 = vmatpush1.msra.mxu0 0.0
    %607 = vmatprep.subr.mxu0 0.0
    %608 = vmatpush1.msra.mxu0 0.0
    %609 = vmatprep.subr.mxu0 0.0
    %610 = vmatpush1.msra.mxu0 0.0
    %611 = vmatprep.subr.mxu0 0.0
    %612 = vmatpush1.msra.mxu0 0.0
    %613 = vmatprep.subr.mxu0 0.0
    %614 = vmatpush1.msra.mxu0 0.0
    %615 = vmatprep.subr.mxu0 0.0
    %616 = vmatpush1.msra.mxu0 0.0
    %617 = vmatprep.subr.mxu0 0.0
    %618 = vmatpush1.msra.mxu0 0.0
    %619 = vmatprep.subr.mxu0 0.0
    %620 = vmatpush1.msra.mxu0 0.0
    %621 = vmatprep.subr.mxu0 0.0
    %622 = vmatpush1.msra.mxu0 0.0
    %623 = vmatprep.subr.mxu0 0.0
    %624 = vmatpush1.msra.mxu0 0.0
    %625 = vmatprep.subr.mxu0 0.0
    %626 = vmatpush1.msra.mxu0 0.0
    %627 = vmatprep.subr.mxu0 0.0
    %628 = vmatpush1.msra.mxu0 0.0
    %629 = vmatprep.subr.mxu0 0.0
    %630 = vmatpush1.msra.mxu0 0.0
    %631 = vmatprep.subr.mxu0 0.0
    %632 = vmatpush1.msra.mxu0 0.0
    %633 = vmatprep.subr.mxu0 0.0
    %634 = vmatpush1.msra.mxu0 0.0
    %635 = vmatprep.subr.mxu0 0.0
    %636 = vmatpush1.msra.mxu0 0.0
    %637 = vmatprep.subr.mxu0 0.0
    %638 = vmatpush1.msra.mxu0 0.0
    %639 = vmatprep.subr.mxu0 0.0
    %640 = vmatpush1.msra.mxu0 0.0
    %641 = vmatprep.subr.mxu0 0.0
    %642 = vmatpush1.msra.mxu0 0.0
    %643 = vmatprep.subr.mxu0 0.0
    %644 = vmatpush1.msra.mxu0 0.0
    %645 = vmatprep.subr.mxu0 0.0
    %646 = vmatpush1.msra.mxu0 0.0
    %647 = vmatprep.subr.mxu0 0.0
    %648 = vmatpush1.msra.mxu0 0.0
    %649 = vmatprep.subr.mxu0 0.0
    %650 = vmatpush1.msra.mxu0 0.0
    %651 = vmatprep.mubr.f32.mxu0 0.0
    %v652 = vand.u32 %v504, 4294901760
    %653 = vmatmul.mubr.f32.gmra.mrb[0].mxu0 %v652
    %v654 = vpop.f32.mrb[0].mxu0
    %v655 = vadd.f32 %v579, %v654
    %v656 = vpop.f32.mrb[0].mxu0
    %657 = vdwg.mxu0
    %658 = vmatprep.subr.mxu0 0.0
    %v659 = vand.u32 %v496, 4294901760
    %v660 = vsub.f32 %v496, %v659
    %661 = vmatpush1.msra.mxu0 %v660
    %662 = vmatprep.subr.mxu0 0.0
    %663 = vmatpush1.msra.mxu0 0.0
    %664 = vmatprep.subr.mxu0 0.0
    %665 = vmatpush1.msra.mxu0 0.0
    %666 = vmatprep.subr.mxu0 0.0
    %667 = vmatpush1.msra.mxu0 0.0
    %668 = vmatprep.subr.mxu0 0.0
    %669 = vmatpush1.msra.mxu0 0.0
    %670 = vmatprep.subr.mxu0 0.0
    %671 = vmatpush1.msra.mxu0 0.0
    %672 = vmatprep.subr.mxu0 0.0
    %673 = vmatpush1.msra.mxu0 0.0
    %674 = vmatprep.subr.mxu0 0.0
    %675 = vmatpush1.msra.mxu0 0.0
    %676 = vmatprep.subr.mxu0 0.0
    %677 = vmatpush1.msra.mxu0 0.0
    %678 = vmatprep.subr.mxu0 0.0
    %679 = vmatpush1.msra.mxu0 0.0
    %680 = vmatprep.subr.mxu0 0.0
    %681 = vmatpush1.msra.mxu0 0.0
    %682 = vmatprep.subr.mxu0 0.0
    %683 = vmatpush1.msra.mxu0 0.0
    %684 = vmatprep.subr.mxu0 0.0
    %685 = vmatpush1.msra.mxu0 0.0
    %686 = vmatprep.subr.mxu0 0.0
    %687 = vmatpush1.msra.mxu0 0.0
    %688 = vmatprep.subr.mxu0 0.0
    %689 = vmatpush1.msra.mxu0 0.0
    %690 = vmatprep.subr.mxu0 0.0
    %691 = vmatpush1.msra.mxu0 0.0
    %692 = vmatprep.subr.mxu0 0.0
    %693 = vmatpush1.msra.mxu0 0.0
    %694 = vmatprep.subr.mxu0 0.0
    %695 = vmatpush1.msra.mxu0 0.0
    %696 = vmatprep.subr.mxu0 0.0
    %697 = vmatpush1.msra.mxu0 0.0
    %698 = vmatprep.subr.mxu0 0.0
    %699 = vmatpush1.msra.mxu0 0.0
    %700 = vmatprep.subr.mxu0 0.0
    %701 = vmatpush1.msra.mxu0 0.0
    %702 = vmatprep.subr.mxu0 0.0
    %703 = vmatpush1.msra.mxu0 0.0
    %704 = vmatprep.subr.mxu0 0.0
    %705 = vmatpush1.msra.mxu0 0.0
    %706 = vmatprep.subr.mxu0 0.0
    %707 = vmatpush1.msra.mxu0 0.0
    %708 = vmatprep.subr.mxu0 0.0
    %709 = vmatpush1.msra.mxu0 0.0
    %710 = vmatprep.subr.mxu0 0.0
    %711 = vmatpush1.msra.mxu0 0.0
    %712 = vmatprep.subr.mxu0 0.0
    %713 = vmatpush1.msra.mxu0 0.0
    %714 = vmatprep.subr.mxu0 0.0
    %715 = vmatpush1.msra.mxu0 0.0
    %716 = vmatprep.subr.mxu0 0.0
    %717 = vmatpush1.msra.mxu0 0.0
    %718 = vmatprep.subr.mxu0 0.0
    %719 = vmatpush1.msra.mxu0 0.0
    %720 = vmatprep.subr.mxu0 0.0
    %721 = vmatpush1.msra.mxu0 0.0
    %722 = vmatprep.subr.mxu0 0.0
    %723 = vmatpush1.msra.mxu0 0.0
    %724 = vmatprep.mubr.f32.mxu0 0.0
    %v725 = vand.u32 %v504, 4294901760
    %v726 = vsub.f32 %v504, %v725
    %727 = vmatmul.mubr.f32.gmra.mrb[0].mxu0 %v726
    %v728 = vpop.f32.mrb[0].mxu0
    %v729 = vadd.f32 %v655, %v728
    %v730 = vpop.f32.mrb[0].mxu0
    %731 = vdwg.mxu0
    %732 = vmatprep.subr.mxu0 0.0
    %v733 = vand.u32 %v496, 4294901760
    %734 = vmatpush1.msra.mxu0 %v733
    %735 = vmatprep.subr.mxu0 0.0
    %736 = vmatpush1.msra.mxu0 0.0
    %737 = vmatprep.subr.mxu0 0.0
    %738 = vmatpush1.msra.mxu0 0.0
    %739 = vmatprep.subr.mxu0 0.0
    %740 = vmatpush1.msra.mxu0 0.0
    %741 = vmatprep.subr.mxu0 0.0
    %742 = vmatpush1.msra.mxu0 0.0
    %743 = vmatprep.subr.mxu0 0.0
    %744 = vmatpush1.msra.mxu0 0.0
    %745 = vmatprep.subr.mxu0 0.0
    %746 = vmatpush1.msra.mxu0 0.0
    %747 = vmatprep.subr.mxu0 0.0
    %748 = vmatpush1.msra.mxu0 0.0
    %749 = vmatprep.subr.mxu0 0.0
    %750 = vmatpush1.msra.mxu0 0.0
    %751 = vmatprep.subr.mxu0 0.0
    %752 = vmatpush1.msra.mxu0 0.0
    %753 = vmatprep.subr.mxu0 0.0
    %754 = vmatpush1.msra.mxu0 0.0
    %755 = vmatprep.subr.mxu0 0.0
    %756 = vmatpush1.msra.mxu0 0.0
    %757 = vmatprep.subr.mxu0 0.0
    %758 = vmatpush1.msra.mxu0 0.0
    %759 = vmatprep.subr.mxu0 0.0
    %760 = vmatpush1.msra.mxu0 0.0
    %761 = vmatprep.subr.mxu0 0.0
    %762 = vmatpush1.msra.mxu0 0.0
    %763 = vmatprep.subr.mxu0 0.0
    %764 = vmatpush1.msra.mxu0 0.0
    %765 = vmatprep.subr.mxu0 0.0
    %766 = vmatpush1.msra.mxu0 0.0
    %767 = vmatprep.subr.mxu0 0.0
    %768 = vmatpush1.msra.mxu0 0.0
    %769 = vmatprep.subr.mxu0 0.0
    %770 = vmatpush1.msra.mxu0 0.0
    %771 = vmatprep.subr.mxu0 0.0
    %772 = vmatpush1.msra.mxu0 0.0
    %773 = vmatprep.subr.mxu0 0.0
    %774 = vmatpush1.msra.mxu0 0.0
    %775 = vmatprep.subr.mxu0 0.0
    %776 = vmatpush1.msra.mxu0 0.0
    %777 = vmatprep.subr.mxu0 0.0
    %778 = vmatpush1.msra.mxu0 0.0
    %779 = vmatprep.subr.mxu0 0.0
    %780 = vmatpush1.msra.mxu0 0.0
    %781 = vmatprep.subr.mxu0 0.0
    %782 = vmatpush1.msra.mxu0 0.0
    %783 = vmatprep.subr.mxu0 0.0
    %784 = vmatpush1.msra.mxu0 0.0
    %785 = vmatprep.subr.mxu0 0.0
    %786 = vmatpush1.msra.mxu0 0.0
    %787 = vmatprep.subr.mxu0 0.0
    %788 = vmatpush1.msra.mxu0 0.0
    %789 = vmatprep.subr.mxu0 0.0
    %790 = vmatpush1.msra.mxu0 0.0
    %791 = vmatprep.subr.mxu0 0.0
    %792 = vmatpush1.msra.mxu0 0.0
    %793 = vmatprep.subr.mxu0 0.0
    %794 = vmatpush1.msra.mxu0 0.0
    %795 = vmatprep.subr.mxu0 0.0
    %796 = vmatpush1.msra.mxu0 0.0
    %797 = vmatprep.mubr.f32.mxu0 0.0
    %v798 = vand.u32 %v504, 4294901760
    %v799 = vsub.f32 %v504, %v798
    %v800 = vand.u32 %v799, 4294901760
    %801 = vmatmul.mubr.f32.gmra.mrb[0].mxu0 %v800
    %v802 = vpop.f32.mrb[0].mxu0
    %v803 = vadd.f32 %v729, %v802
    %v804 = vpop.f32.mrb[0].mxu0
    %805 = vdwg.mxu0
    %806 = vmatprep.subr.mxu0 0.0
    %v807 = vand.u32 %v496, 4294901760
    %v808 = vsub.f32 %v496, %v807
    %v809 = vand.u32 %v808, 4294901760
    %810 = vmatpush1.msra.mxu0 %v809
    %811 = vmatprep.subr.mxu0 0.0
    %812 = vmatpush1.msra.mxu0 0.0
    %813 = vmatprep.subr.mxu0 0.0
    %814 = vmatpush1.msra.mxu0 0.0
    %815 = vmatprep.subr.mxu0 0.0
    %816 = vmatpush1.msra.mxu0 0.0
    %817 = vmatprep.subr.mxu0 0.0
    %818 = vmatpush1.msra.mxu0 0.0
    %819 = vmatprep.subr.mxu0 0.0
    %820 = vmatpush1.msra.mxu0 0.0
    %821 = vmatprep.subr.mxu0 0.0
    %822 = vmatpush1.msra.mxu0 0.0
    %823 = vmatprep.subr.mxu0 0.0
    %824 = vmatpush1.msra.mxu0 0.0
    %825 = vmatprep.subr.mxu0 0.0
    %826 = vmatpush1.msra.mxu0 0.0
    %827 = vmatprep.subr.mxu0 0.0
    %828 = vmatpush1.msra.mxu0 0.0
    %829 = vmatprep.subr.mxu0 0.0
    %830 = vmatpush1.msra.mxu0 0.0
    %831 = vmatprep.subr.mxu0 0.0
    %832 = vmatpush1.msra.mxu0 0.0
    %833 = vmatprep.subr.mxu0 0.0
    %834 = vmatpush1.msra.mxu0 0.0
    %835 = vmatprep.subr.mxu0 0.0
    %836 = vmatpush1.msra.mxu0 0.0
    %837 = vmatprep.subr.mxu0 0.0
    %838 = vmatpush1.msra.mxu0 0.0
    %839 = vmatprep.subr.mxu0 0.0
    %840 = vmatpush1.msra.mxu0 0.0
    %841 = vmatprep.subr.mxu0 0.0
    %842 = vmatpush1.msra.mxu0 0.0
    %843 = vmatprep.subr.mxu0 0.0
    %844 = vmatpush1.msra.mxu0 0.0
    %845 = vmatprep.subr.mxu0 0.0
    %846 = vmatpush1.msra.mxu0 0.0
    %847 = vmatprep.subr.mxu0 0.0
    %848 = vmatpush1.msra.mxu0 0.0
    %849 = vmatprep.subr.mxu0 0.0
    %850 = vmatpush1.msra.mxu0 0.0
    %851 = vmatprep.subr.mxu0 0.0
    %852 = vmatpush1.msra.mxu0 0.0
    %853 = vmatprep.subr.mxu0 0.0
    %854 = vmatpush1.msra.mxu0 0.0
    %855 = vmatprep.subr.mxu0 0.0
    %856 = vmatpush1.msra.mxu0 0.0
    %857 = vmatprep.subr.mxu0 0.0
    %858 = vmatpush1.msra.mxu0 0.0
    %859 = vmatprep.subr.mxu0 0.0
    %860 = vmatpush1.msra.mxu0 0.0
    %861 = vmatprep.subr.mxu0 0.0
    %862 = vmatpush1.msra.mxu0 0.0
    %863 = vmatprep.subr.mxu0 0.0
    %864 = vmatpush1.msra.mxu0 0.0
    %865 = vmatprep.subr.mxu0 0.0
    %866 = vmatpush1.msra.mxu0 0.0
    %867 = vmatprep.subr.mxu0 0.0
    %868 = vmatpush1.msra.mxu0 0.0
    %869 = vmatprep.subr.mxu0 0.0
    %870 = vmatpush1.msra.mxu0 0.0
    %871 = vmatprep.subr.mxu0 0.0
    %872 = vmatpush1.msra.mxu0 0.0
    %873 = vmatprep.mubr.f32.mxu0 0.0
    %v874 = vand.u32 %v504, 4294901760
    %875 = vmatmul.mubr.f32.gmra.mrb[0].mxu0 %v874
    %v876 = vpop.f32.mrb[0].mxu0
    %v877 = vadd.f32 %v803, %v876
    %v878 = vpop.f32.mrb[0].mxu0
    %879 = vdwg.mxu0
    %880 = vmatprep.subr.mxu0 0.0
    %v881 = vand.u32 %v496, 4294901760
    %882 = vmatpush1.msra.mxu0 %v881
    %883 = vmatprep.subr.mxu0 0.0
    %884 = vmatpush1.msra.mxu0 0.0
    %885 = vmatprep.subr.mxu0 0.0
    %886 = vmatpush1.msra.mxu0 0.0
    %887 = vmatprep.subr.mxu0 0.0
    %888 = vmatpush1.msra.mxu0 0.0
    %889 = vmatprep.subr.mxu0 0.0
    %890 = vmatpush1.msra.mxu0 0.0
    %891 = vmatprep.subr.mxu0 0.0
    %892 = vmatpush1.msra.mxu0 0.0
    %893 = vmatprep.subr.mxu0 0.0
    %894 = vmatpush1.msra.mxu0 0.0
    %895 = vmatprep.subr.mxu0 0.0
    %896 = vmatpush1.msra.mxu0 0.0
    %897 = vmatprep.subr.mxu0 0.0
    %898 = vmatpush1.msra.mxu0 0.0
    %899 = vmatprep.subr.mxu0 0.0
    %900 = vmatpush1.msra.mxu0 0.0
    %901 = vmatprep.subr.mxu0 0.0
    %902 = vmatpush1.msra.mxu0 0.0
    %903 = vmatprep.subr.mxu0 0.0
    %904 = vmatpush1.msra.mxu0 0.0
    %905 = vmatprep.subr.mxu0 0.0
    %906 = vmatpush1.msra.mxu0 0.0
    %907 = vmatprep.subr.mxu0 0.0
    %908 = vmatpush1.msra.mxu0 0.0
    %909 = vmatprep.subr.mxu0 0.0
    %910 = vmatpush1.msra.mxu0 0.0
    %911 = vmatprep.subr.mxu0 0.0
    %912 = vmatpush1.msra.mxu0 0.0
    %913 = vmatprep.subr.mxu0 0.0
    %914 = vmatpush1.msra.mxu0 0.0
    %915 = vmatprep.subr.mxu0 0.0
    %916 = vmatpush1.msra.mxu0 0.0
    %917 = vmatprep.subr.mxu0 0.0
    %918 = vmatpush1.msra.mxu0 0.0
    %919 = vmatprep.subr.mxu0 0.0
    %920 = vmatpush1.msra.mxu0 0.0
    %921 = vmatprep.subr.mxu0 0.0
    %922 = vmatpush1.msra.mxu0 0.0
    %923 = vmatprep.subr.mxu0 0.0
    %924 = vmatpush1.msra.mxu0 0.0
    %925 = vmatprep.subr.mxu0 0.0
    %926 = vmatpush1.msra.mxu0 0.0
    %927 = vmatprep.subr.mxu0 0.0
    %928 = vmatpush1.msra.mxu0 0.0
    %929 = vmatprep.subr.mxu0 0.0
    %930 = vmatpush1.msra.mxu0 0.0
    %931 = vmatprep.subr.mxu0 0.0
    %932 = vmatpush1.msra.mxu0 0.0
    %933 = vmatprep.subr.mxu0 0.0
    %934 = vmatpush1.msra.mxu0 0.0
    %935 = vmatprep.subr.mxu0 0.0
    %936 = vmatpush1.msra.mxu0 0.0
    %937 = vmatprep.subr.mxu0 0.0
    %938 = vmatpush1.msra.mxu0 0.0
    %939 = vmatprep.subr.mxu0 0.0
    %940 = vmatpush1.msra.mxu0 0.0
    %941 = vmatprep.subr.mxu0 0.0
    %942 = vmatpush1.msra.mxu0 0.0
    %943 = vmatprep.subr.mxu0 0.0
    %944 = vmatpush1.msra.mxu0 0.0
    %945 = vmatprep.mubr.f32.mxu0 0.0
    %v946 = vand.u32 %v504, 4294901760
    %947 = vmatmul.mubr.f32.gmra.mrb[0].mxu0 %v946
    %v948 = vpop.f32.mrb[0].mxu0
    %v949 = vadd.f32 %v877, %v948
    %v950 = vpop.f32.mrb[0].mxu0
    %951 = vdwg.mxu0
    %v952 = vtanh.pop %v949
    %953 = vset.pattern.permute.xlu0 24
    %954 = vperm.xlu0 %953, %v36
    %v955 = vpop.permute.xlu0 %954
    %957 = vrot.lane.b32.xlu0 %v36, 112
    %v958 = vpop.permute.xlu0 %957
    %v959 = vsel %vm503, %v958, 0
    %961 = vmatprep.subr.mxu0 0.0
    %v962 = vand.u32 %v952, 4294901760
    %963 = vmatpush1.msra.mxu0 %v962
    %964 = vmatprep.subr.mxu0 0.0
    %965 = vmatpush1.msra.mxu0 0.0
    %966 = vmatprep.subr.mxu0 0.0
    %967 = vmatpush1.msra.mxu0 0.0
    %968 = vmatprep.subr.mxu0 0.0
    %969 = vmatpush1.msra.mxu0 0.0
    %970 = vmatprep.subr.mxu0 0.0
    %971 = vmatpush1.msra.mxu0 0.0
    %972 = vmatprep.subr.mxu0 0.0
    %973 = vmatpush1.msra.mxu0 0.0
    %974 = vmatprep.subr.mxu0 0.0
    %975 = vmatpush1.msra.mxu0 0.0
    %976 = vmatprep.subr.mxu0 0.0
    %977 = vmatpush1.msra.mxu0 0.0
    %978 = vmatprep.subr.mxu0 0.0
    %979 = vmatpush1.msra.mxu0 0.0
    %980 = vmatprep.subr.mxu0 0.0
    %981 = vmatpush1.msra.mxu0 0.0
    %982 = vmatprep.subr.mxu0 0.0
    %983 = vmatpush1.msra.mxu0 0.0
    %984 = vmatprep.subr.mxu0 0.0
    %985 = vmatpush1.msra.mxu0 0.0
    %986 = vmatprep.subr.mxu0 0.0
    %987 = vmatpush1.msra.mxu0 0.0
    %988 = vmatprep.subr.mxu0 0.0
    %989 = vmatpush1.msra.mxu0 0.0
    %990 = vmatprep.subr.mxu0 0.0
    %991 = vmatpush1.msra.mxu0 0.0
    %992 = vmatprep.subr.mxu0 0.0
    %993 = vmatpush1.msra.mxu0 0.0
    %994 = vmatprep.subr.mxu0 0.0
    %995 = vmatpush1.msra.mxu0 0.0
    %996 = vmatprep.subr.mxu0 0.0
    %997 = vmatpush1.msra.mxu0 0.0
    %998 = vmatprep.subr.mxu0 0.0
    %999 = vmatpush1.msra.mxu0 0.0
    %1000 = vmatprep.subr.mxu0 0.0
    %1001 = vmatpush1.msra.mxu0 0.0
    %1002 = vmatprep.subr.mxu0 0.0
    %1003 = vmatpush1.msra.mxu0 0.0
    %1004 = vmatprep.subr.mxu0 0.0
    %1005 = vmatpush1.msra.mxu0 0.0
    %1006 = vmatprep.subr.mxu0 0.0
    %1007 = vmatpush1.msra.mxu0 0.0
    %1008 = vmatprep.subr.mxu0 0.0
    %1009 = vmatpush1.msra.mxu0 0.0
    %1010 = vmatprep.subr.mxu0 0.0
    %1011 = vmatpush1.msra.mxu0 0.0
    %1012 = vmatprep.subr.mxu0 0.0
    %1013 = vmatpush1.msra.mxu0 0.0
    %1014 = vmatprep.subr.mxu0 0.0
    %1015 = vmatpush1.msra.mxu0 0.0
    %1016 = vmatprep.subr.mxu0 0.0
    %1017 = vmatpush1.msra.mxu0 0.0
    %1018 = vmatprep.subr.mxu0 0.0
    %1019 = vmatpush1.msra.mxu0 0.0
    %1020 = vmatprep.subr.mxu0 0.0
    %1021 = vmatpush1.msra.mxu0 0.0
    %1022 = vmatprep.subr.mxu0 0.0
    %1023 = vmatpush1.msra.mxu0 0.0
    %1024 = vmatprep.subr.mxu0 0.0
    %1025 = vmatpush1.msra.mxu0 0.0
    %1026 = vmatprep.mubr.f32.mxu0 0.0
    %v1027 = vand.u32 %v959, 4294901760
    %v1028 = vsub.f32 %v959, %v1027
    %v1029 = vand.u32 %v1028, 4294901760
    %v1030 = vsub.f32 %v1028, %v1029
    %v1031 = vand.u32 %v1030, 4294901760
    %1032 = vmatmul.mubr.f32.gmra.mrb[0].mxu0 %v1031
    %v1033 = vpop.f32.mrb[0].mxu0
    %v1034 = vadd.f32 %v955, %v1033
    %v1035 = vpop.f32.mrb[0].mxu0
    %1036 = vdwg.mxu0
    %1037 = vmatprep.subr.mxu0 0.0
    %v1038 = vand.u32 %v952, 4294901760
    %v1039 = vsub.f32 %v952, %v1038
    %v1040 = vand.u32 %v1039, 4294901760
    %v1041 = vsub.f32 %v1039, %v1040
    %v1042 = vand.u32 %v1041, 4294901760
    %1043 = vmatpush1.msra.mxu0 %v1042
    %1044 = vmatprep.subr.mxu0 0.0
    %1045 = vmatpush1.msra.mxu0 0.0
    %1046 = vmatprep.subr.mxu0 0.0
    %1047 = vmatpush1.msra.mxu0 0.0
    %1048 = vmatprep.subr.mxu0 0.0
    %1049 = vmatpush1.msra.mxu0 0.0
    %1050 = vmatprep.subr.mxu0 0.0
    %1051 = vmatpush1.msra.mxu0 0.0
    %1052 = vmatprep.subr.mxu0 0.0
    %1053 = vmatpush1.msra.mxu0 0.0
    %1054 = vmatprep.subr.mxu0 0.0
    %1055 = vmatpush1.msra.mxu0 0.0
    %1056 = vmatprep.subr.mxu0 0.0
    %1057 = vmatpush1.msra.mxu0 0.0
    %1058 = vmatprep.subr.mxu0 0.0
    %1059 = vmatpush1.msra.mxu0 0.0
    %1060 = vmatprep.subr.mxu0 0.0
    %1061 = vmatpush1.msra.mxu0 0.0
    %1062 = vmatprep.subr.mxu0 0.0
    %1063 = vmatpush1.msra.mxu0 0.0
    %1064 = vmatprep.subr.mxu0 0.0
    %1065 = vmatpush1.msra.mxu0 0.0
    %1066 = vmatprep.subr.mxu0 0.0
    %1067 = vmatpush1.msra.mxu0 0.0
    %1068 = vmatprep.subr.mxu0 0.0
    %1069 = vmatpush1.msra.mxu0 0.0
    %1070 = vmatprep.subr.mxu0 0.0
    %1071 = vmatpush1.msra.mxu0 0.0
    %1072 = vmatprep.subr.mxu0 0.0
    %1073 = vmatpush1.msra.mxu0 0.0
    %1074 = vmatprep.subr.mxu0 0.0
    %1075 = vmatpush1.msra.mxu0 0.0
    %1076 = vmatprep.subr.mxu0 0.0
    %1077 = vmatpush1.msra.mxu0 0.0
    %1078 = vmatprep.subr.mxu0 0.0
    %1079 = vmatpush1.msra.mxu0 0.0
    %1080 = vmatprep.subr.mxu0 0.0
    %1081 = vmatpush1.msra.mxu0 0.0
    %1082 = vmatprep.subr.mxu0 0.0
    %1083 = vmatpush1.msra.mxu0 0.0
    %1084 = vmatprep.subr.mxu0 0.0
    %1085 = vmatpush1.msra.mxu0 0.0
    %1086 = vmatprep.subr.mxu0 0.0
    %1087 = vmatpush1.msra.mxu0 0.0
    %1088 = vmatprep.subr.mxu0 0.0
    %1089 = vmatpush1.msra.mxu0 0.0
    %1090 = vmatprep.subr.mxu0 0.0
    %1091 = vmatpush1.msra.mxu0 0.0
    %1092 = vmatprep.subr.mxu0 0.0
    %1093 = vmatpush1.msra.mxu0 0.0
    %1094 = vmatprep.subr.mxu0 0.0
    %1095 = vmatpush1.msra.mxu0 0.0
    %1096 = vmatprep.subr.mxu0 0.0
    %1097 = vmatpush1.msra.mxu0 0.0
    %1098 = vmatprep.subr.mxu0 0.0
    %1099 = vmatpush1.msra.mxu0 0.0
    %1100 = vmatprep.subr.mxu0 0.0
    %1101 = vmatpush1.msra.mxu0 0.0
    %1102 = vmatprep.subr.mxu0 0.0
    %1103 = vmatpush1.msra.mxu0 0.0
    %1104 = vmatprep.subr.mxu0 0.0
    %1105 = vmatpush1.msra.mxu0 0.0
    %1106 = vmatprep.mubr.f32.mxu0 0.0
    %v1107 = vand.u32 %v959, 4294901760
    %1108 = vmatmul.mubr.f32.gmra.mrb[0].mxu0 %v1107
    %v1109 = vpop.f32.mrb[0].mxu0
    %v1110 = vadd.f32 %v1034, %v1109
    %v1111 = vpop.f32.mrb[0].mxu0
    %1112 = vdwg.mxu0
    %1113 = vmatprep.subr.mxu0 0.0
    %v1114 = vand.u32 %v952, 4294901760
    %v1115 = vsub.f32 %v952, %v1114
    %1116 = vmatpush1.msra.mxu0 %v1115
    %1117 = vmatprep.subr.mxu0 0.0
    %1118 = vmatpush1.msra.mxu0 0.0
    %1119 = vmatprep.subr.mxu0 0.0
    %1120 = vmatpush1.msra.mxu0 0.0
    %1121 = vmatprep.subr.mxu0 0.0
    %1122 = vmatpush1.msra.mxu0 0.0
    %1123 = vmatprep.subr.mxu0 0.0
    %1124 = vmatpush1.msra.mxu0 0.0
    %1125 = vmatprep.subr.mxu0 0.0
    %1126 = vmatpush1.msra.mxu0 0.0
    %1127 = vmatprep.subr.mxu0 0.0
    %1128 = vmatpush1.msra.mxu0 0.0
    %1129 = vmatprep.subr.mxu0 0.0
    %1130 = vmatpush1.msra.mxu0 0.0
    %1131 = vmatprep.subr.mxu0 0.0
    %1132 = vmatpush1.msra.mxu0 0.0
    %1133 = vmatprep.subr.mxu0 0.0
    %1134 = vmatpush1.msra.mxu0 0.0
    %1135 = vmatprep.subr.mxu0 0.0
    %1136 = vmatpush1.msra.mxu0 0.0
    %1137 = vmatprep.subr.mxu0 0.0
    %1138 = vmatpush1.msra.mxu0 0.0
    %1139 = vmatprep.subr.mxu0 0.0
    %1140 = vmatpush1.msra.mxu0 0.0
    %1141 = vmatprep.subr.mxu0 0.0
    %1142 = vmatpush1.msra.mxu0 0.0
    %1143 = vmatprep.subr.mxu0 0.0
    %1144 = vmatpush1.msra.mxu0 0.0
    %1145 = vmatprep.subr.mxu0 0.0
    %1146 = vmatpush1.msra.mxu0 0.0
    %1147 = vmatprep.subr.mxu0 0.0
    %1148 = vmatpush1.msra.mxu0 0.0
    %1149 = vmatprep.subr.mxu0 0.0
    %1150 = vmatpush1.msra.mxu0 0.0
    %1151 = vmatprep.subr.mxu0 0.0
    %1152 = vmatpush1.msra.mxu0 0.0
    %1153 = vmatprep.subr.mxu0 0.0
    %1154 = vmatpush1.msra.mxu0 0.0
    %1155 = vmatprep.subr.mxu0 0.0
    %1156 = vmatpush1.msra.mxu0 0.0
    %1157 = vmatprep.subr.mxu0 0.0
    %1158 = vmatpush1.msra.mxu0 0.0
    %1159 = vmatprep.subr.mxu0 0.0
    %1160 = vmatpush1.msra.mxu0 0.0
    %1161 = vmatprep.subr.mxu0 0.0
    %1162 = vmatpush1.msra.mxu0 0.0
    %1163 = vmatprep.subr.mxu0 0.0
    %1164 = vmatpush1.msra.mxu0 0.0
    %1165 = vmatprep.subr.mxu0 0.0
    %1166 = vmatpush1.msra.mxu0 0.0
    %1167 = vmatprep.subr.mxu0 0.0
    %1168 = vmatpush1.msra.mxu0 0.0
    %1169 = vmatprep.subr.mxu0 0.0
    %1170 = vmatpush1.msra.mxu0 0.0
    %1171 = vmatprep.subr.mxu0 0.0
    %1172 = vmatpush1.msra.mxu0 0.0
    %1173 = vmatprep.subr.mxu0 0.0
    %1174 = vmatpush1.msra.mxu0 0.0
    %1175 = vmatprep.subr.mxu0 0.0
    %1176 = vmatpush1.msra.mxu0 0.0
    %1177 = vmatprep.subr.mxu0 0.0
    %1178 = vmatpush1.msra.mxu0 0.0
    %1179 = vmatprep.mubr.f32.mxu0 0.0
    %v1180 = vand.u32 %v959, 4294901760
    %v1181 = vsub.f32 %v959, %v1180
    %1182 = vmatmul.mubr.f32.gmra.mrb[0].mxu0 %v1181
    %v1183 = vpop.f32.mrb[0].mxu0
    %v1184 = vadd.f32 %v1110, %v1183
    %v1185 = vpop.f32.mrb[0].mxu0
    %1186 = vdwg.mxu0
    %1187 = vmatprep.subr.mxu0 0.0
    %v1188 = vand.u32 %v952, 4294901760
    %1189 = vmatpush1.msra.mxu0 %v1188
    %1190 = vmatprep.subr.mxu0 0.0
    %1191 = vmatpush1.msra.mxu0 0.0
    %1192 = vmatprep.subr.mxu0 0.0
    %1193 = vmatpush1.msra.mxu0 0.0
    %1194 = vmatprep.subr.mxu0 0.0
    %1195 = vmatpush1.msra.mxu0 0.0
    %1196 = vmatprep.subr.mxu0 0.0
    %1197 = vmatpush1.msra.mxu0 0.0
    %1198 = vmatprep.subr.mxu0 0.0
    %1199 = vmatpush1.msra.mxu0 0.0
    %1200 = vmatprep.subr.mxu0 0.0
    %1201 = vmatpush1.msra.mxu0 0.0
    %1202 = vmatprep.subr.mxu0 0.0
    %1203 = vmatpush1.msra.mxu0 0.0
    %1204 = vmatprep.subr.mxu0 0.0
    %1205 = vmatpush1.msra.mxu0 0.0
    %1206 = vmatprep.subr.mxu0 0.0
    %1207 = vmatpush1.msra.mxu0 0.0
    %1208 = vmatprep.subr.mxu0 0.0
    %1209 = vmatpush1.msra.mxu0 0.0
    %1210 = vmatprep.subr.mxu0 0.0
    %1211 = vmatpush1.msra.mxu0 0.0
    %1212 = vmatprep.subr.mxu0 0.0
    %1213 = vmatpush1.msra.mxu0 0.0
    %1214 = vmatprep.subr.mxu0 0.0
    %1215 = vmatpush1.msra.mxu0 0.0
    %1216 = vmatprep.subr.mxu0 0.0
    %1217 = vmatpush1.msra.mxu0 0.0
    %1218 = vmatprep.subr.mxu0 0.0
    %1219 = vmatpush1.msra.mxu0 0.0
    %1220 = vmatprep.subr.mxu0 0.0
    %1221 = vmatpush1.msra.mxu0 0.0
    %1222 = vmatprep.subr.mxu0 0.0
    %1223 = vmatpush1.msra.mxu0 0.0
    %1224 = vmatprep.subr.mxu0 0.0
    %1225 = vmatpush1.msra.mxu0 0.0
    %1226 = vmatprep.subr.mxu0 0.0
    %1227 = vmatpush1.msra.mxu0 0.0
    %1228 = vmatprep.subr.mxu0 0.0
    %1229 = vmatpush1.msra.mxu0 0.0
    %1230 = vmatprep.subr.mxu0 0.0
    %1231 = vmatpush1.msra.mxu0 0.0
    %1232 = vmatprep.subr.mxu0 0.0
    %1233 = vmatpush1.msra.mxu0 0.0
    %1234 = vmatprep.subr.mxu0 0.0
    %1235 = vmatpush1.msra.mxu0 0.0
    %1236 = vmatprep.subr.mxu0 0.0
    %1237 = vmatpush1.msra.mxu0 0.0
    %1238 = vmatprep.subr.mxu0 0.0
    %1239 = vmatpush1.msra.mxu0 0.0
    %1240 = vmatprep.subr.mxu0 0.0
    %1241 = vmatpush1.msra.mxu0 0.0
    %1242 = vmatprep.subr.mxu0 0.0
    %1243 = vmatpush1.msra.mxu0 0.0
    %1244 = vmatprep.subr.mxu0 0.0
    %1245 = vmatpush1.msra.mxu0 0.0
    %1246 = vmatprep.subr.mxu0 0.0
    %1247 = vmatpush1.msra.mxu0 0.0
    %1248 = vmatprep.subr.mxu0 0.0
    %1249 = vmatpush1.msra.mxu0 0.0
    %1250 = vmatprep.subr.mxu0 0.0
    %1251 = vmatpush1.msra.mxu0 0.0
    %1252 = vmatprep.mubr.f32.mxu0 0.0
    %v1253 = vand.u32 %v959, 4294901760
    %v1254 = vsub.f32 %v959, %v1253
    %v1255 = vand.u32 %v1254, 4294901760
    %1256 = vmatmul.mubr.f32.gmra.mrb[0].mxu0 %v1255
    %v1257 = vpop.f32.mrb[0].mxu0
    %v1258 = vadd.f32 %v1184, %v1257
    %v1259 = vpop.f32.mrb[0].mxu0
    %1260 = vdwg.mxu0
    %1261 = vmatprep.subr.mxu0 0.0
    %v1262 = vand.u32 %v952, 4294901760
    %v1263 = vsub.f32 %v952, %v1262
    %v1264 = vand.u32 %v1263, 4294901760
    %1265 = vmatpush1.msra.mxu0 %v1264
    %1266 = vmatprep.subr.mxu0 0.0
    %1267 = vmatpush1.msra.mxu0 0.0
    %1268 = vmatprep.subr.mxu0 0.0
    %1269 = vmatpush1.msra.mxu0 0.0
    %1270 = vmatprep.subr.mxu0 0.0
    %1271 = vmatpush1.msra.mxu0 0.0
    %1272 = vmatprep.subr.mxu0 0.0
    %1273 = vmatpush1.msra.mxu0 0.0
    %1274 = vmatprep.subr.mxu0 0.0
    %1275 = vmatpush1.msra.mxu0 0.0
    %1276 = vmatprep.subr.mxu0 0.0
    %1277 = vmatpush1.msra.mxu0 0.0
    %1278 = vmatprep.subr.mxu0 0.0
    %1279 = vmatpush1.msra.mxu0 0.0
    %1280 = vmatprep.subr.mxu0 0.0
    %1281 = vmatpush1.msra.mxu0 0.0
    %1282 = vmatprep.subr.mxu0 0.0
    %1283 = vmatpush1.msra.mxu0 0.0
    %1284 = vmatprep.subr.mxu0 0.0
    %1285 = vmatpush1.msra.mxu0 0.0
    %1286 = vmatprep.subr.mxu0 0.0
    %1287 = vmatpush1.msra.mxu0 0.0
    %1288 = vmatprep.subr.mxu0 0.0
    %1289 = vmatpush1.msra.mxu0 0.0
    %1290 = vmatprep.subr.mxu0 0.0
    %1291 = vmatpush1.msra.mxu0 0.0
    %1292 = vmatprep.subr.mxu0 0.0
    %1293 = vmatpush1.msra.mxu0 0.0
    %1294 = vmatprep.subr.mxu0 0.0
    %1295 = vmatpush1.msra.mxu0 0.0
    %1296 = vmatprep.subr.mxu0 0.0
    %1297 = vmatpush1.msra.mxu0 0.0
    %1298 = vmatprep.subr.mxu0 0.0
    %1299 = vmatpush1.msra.mxu0 0.0
    %1300 = vmatprep.subr.mxu0 0.0
    %1301 = vmatpush1.msra.mxu0 0.0
    %1302 = vmatprep.subr.mxu0 0.0
    %1303 = vmatpush1.msra.mxu0 0.0
    %1304 = vmatprep.subr.mxu0 0.0
    %1305 = vmatpush1.msra.mxu0 0.0
    %1306 = vmatprep.subr.mxu0 0.0
    %1307 = vmatpush1.msra.mxu0 0.0
    %1308 = vmatprep.subr.mxu0 0.0
    %1309 = vmatpush1.msra.mxu0 0.0
    %1310 = vmatprep.subr.mxu0 0.0
    %1311 = vmatpush1.msra.mxu0 0.0
    %1312 = vmatprep.subr.mxu0 0.0
    %1313 = vmatpush1.msra.mxu0 0.0
    %1314 = vmatprep.subr.mxu0 0.0
    %1315 = vmatpush1.msra.mxu0 0.0
    %1316 = vmatprep.subr.mxu0 0.0
    %1317 = vmatpush1.msra.mxu0 0.0
    %1318 = vmatprep.subr.mxu0 0.0
    %1319 = vmatpush1.msra.mxu0 0.0
    %1320 = vmatprep.subr.mxu0 0.0
    %1321 = vmatpush1.msra.mxu0 0.0
    %1322 = vmatprep.subr.mxu0 0.0
    %1323 = vmatpush1.msra.mxu0 0.0
    %1324 = vmatprep.subr.mxu0 0.0
    %1325 = vmatpush1.msra.mxu0 0.0
    %1326 = vmatprep.subr.mxu0 0.0
    %1327 = vmatpush1.msra.mxu0 0.0
    %1328 = vmatprep.mubr.f32.mxu0 0.0
    %v1329 = vand.u32 %v959, 4294901760
    %1330 = vmatmul.mubr.f32.gmra.mrb[0].mxu0 %v1329
    %v1331 = vpop.f32.mrb[0].mxu0
    %v1332 = vadd.f32 %v1258, %v1331
    %v1333 = vpop.f32.mrb[0].mxu0
    %1334 = vdwg.mxu0
    %1335 = vmatprep.subr.mxu0 0.0
    %v1336 = vand.u32 %v952, 4294901760
    %1337 = vmatpush1.msra.mxu0 %v1336
    %1338 = vmatprep.subr.mxu0 0.0
    %1339 = vmatpush1.msra.mxu0 0.0
    %1340 = vmatprep.subr.mxu0 0.0
    %1341 = vmatpush1.msra.mxu0 0.0
    %1342 = vmatprep.subr.mxu0 0.0
    %1343 = vmatpush1.msra.mxu0 0.0
    %1344 = vmatprep.subr.mxu0 0.0
    %1345 = vmatpush1.msra.mxu0 0.0
    %1346 = vmatprep.subr.mxu0 0.0
    %1347 = vmatpush1.msra.mxu0 0.0
    %1348 = vmatprep.subr.mxu0 0.0
    %1349 = vmatpush1.msra.mxu0 0.0
    %1350 = vmatprep.subr.mxu0 0.0
    %1351 = vmatpush1.msra.mxu0 0.0
    %1352 = vmatprep.subr.mxu0 0.0
    %1353 = vmatpush1.msra.mxu0 0.0
    %1354 = vmatprep.subr.mxu0 0.0
    %1355 = vmatpush1.msra.mxu0 0.0
    %1356 = vmatprep.subr.mxu0 0.0
    %1357 = vmatpush1.msra.mxu0 0.0
    %1358 = vmatprep.subr.mxu0 0.0
    %1359 = vmatpush1.msra.mxu0 0.0
    %1360 = vmatprep.subr.mxu0 0.0
    %1361 = vmatpush1.msra.mxu0 0.0
    %1362 = vmatprep.subr.mxu0 0.0
    %1363 = vmatpush1.msra.mxu0 0.0
    %1364 = vmatprep.subr.mxu0 0.0
    %1365 = vmatpush1.msra.mxu0 0.0
    %1366 = vmatprep.subr.mxu0 0.0
    %1367 = vmatpush1.msra.mxu0 0.0
    %1368 = vmatprep.subr.mxu0 0.0
    %1369 = vmatpush1.msra.mxu0 0.0
    %1370 = vmatprep.subr.mxu0 0.0
    %1371 = vmatpush1.msra.mxu0 0.0
    %1372 = vmatprep.subr.mxu0 0.0
    %1373 = vmatpush1.msra.mxu0 0.0
    %1374 = vmatprep.subr.mxu0 0.0
    %1375 = vmatpush1.msra.mxu0 0.0
    %1376 = vmatprep.subr.mxu0 0.0
    %1377 = vmatpush1.msra.mxu0 0.0
    %1378 = vmatprep.subr.mxu0 0.0
    %1379 = vmatpush1.msra.mxu0 0.0
    %1380 = vmatprep.subr.mxu0 0.0
    %1381 = vmatpush1.msra.mxu0 0.0
    %1382 = vmatprep.subr.mxu0 0.0
    %1383 = vmatpush1.msra.mxu0 0.0
    %1384 = vmatprep.subr.mxu0 0.0
    %1385 = vmatpush1.msra.mxu0 0.0
    %1386 = vmatprep.subr.mxu0 0.0
    %1387 = vmatpush1.msra.mxu0 0.0
    %1388 = vmatprep.subr.mxu0 0.0
    %1389 = vmatpush1.msra.mxu0 0.0
    %1390 = vmatprep.subr.mxu0 0.0
    %1391 = vmatpush1.msra.mxu0 0.0
    %1392 = vmatprep.subr.mxu0 0.0
    %1393 = vmatpush1.msra.mxu0 0.0
    %1394 = vmatprep.subr.mxu0 0.0
    %1395 = vmatpush1.msra.mxu0 0.0
    %1396 = vmatprep.subr.mxu0 0.0
    %1397 = vmatpush1.msra.mxu0 0.0
    %1398 = vmatprep.subr.mxu0 0.0
    %1399 = vmatpush1.msra.mxu0 0.0
    %1400 = vmatprep.mubr.f32.mxu0 0.0
    %v1401 = vand.u32 %v959, 4294901760
    %1402 = vmatmul.mubr.f32.gmra.mrb[0].mxu0 %v1401
    %v1403 = vpop.f32.mrb[0].mxu0
    %v1404 = vadd.f32 %v1332, %v1403
    %v1405 = vpop.f32.mrb[0].mxu0
    %1406 = vdwg.mxu0
    %v1407 = vtanh.pop %v1404
    %1408 = vst [vmem:[#allocation7] sm:$0xf] %v1407
    // Predicated region
    $region18: #{tpu_custom_call.1} parent=1 // pred_check
      _
    $region19: #{tpu_custom_call.1} parent=1 // pred_check_branch
      %1410 = sbr.rel (0) target = $region21
    $region20: #{tpu_custom_call.1} parent=1 // pred_region
      %s1412 = ssub.s32 64, 64
      %1413 = vsyncadd [#allocation4], %s1412
      %s1415 = sshll.u32 [#allocation7], 4
      %s1416 = int_to_ptr.vmem [resolvable:$true] %s1415
      %1418 = dma.vmem_to_hbm [thread:$0]  %s1416, 64, %s2, [#allocation4]
    $region21: #{tpu_custom_call.1} parent=1 // pred_fallthru
      _
    // Predicated region
    $region22: #{tpu_custom_call.1} parent=1 // pred_check
      _
    $region23: #{tpu_custom_call.1} parent=1 // pred_check_branch
      %1420 = sbr.rel (0) target = $region25
    $region24: #{tpu_custom_call.1} parent=1 // pred_region
      %1421 = dma.done [#allocation4], 64
    $region25: #{tpu_custom_call.1} parent=1 // pred_fallthru
      _
    %1422 = vsyncpa [#allocation3], 1
    %1423 = vsyncpa [#allocation6], 1
    %1424 = vsyncpa [#allocation4], 1

</llo_original>
